<compile_context>
chip_gen: v5e
topology: v5e:2x2
jax: 0.10.0
libtpu: 0.0.40
codegen_flags: <defaults>
</compile_context>

<pallas_src>
import math
import functools

import jax
import jax.numpy as jnp
from jax.experimental import pallas as pl
from jax.experimental.pallas import tpu as pltpu


def _round_up(x, m):
    return (x + m - 1) // m * m


def _patch_upsample(x, ps):
    # (B, C, h, w) -> (B, C, h*ps, w*ps) via broadcast+reshape (no gather-style repeat)
    B, C, h, w = x.shape
    x = x.reshape(B, C, h, 1, w, 1)
    x = jnp.broadcast_to(x, (B, C, h, ps, w, ps))
    return x.reshape(B, C, h * ps, w * ps)


# ----------------------------------------------------------------------------
# Fused matmul kernel:  o = (a @ b) + bias + residual   (M tiled, K/N whole)
# ----------------------------------------------------------------------------
def _mm_kernel(*refs, has_bias, has_res):
    a_ref, b_ref = refs[0], refs[1]
    o_ref = refs[-1]
    acc = jnp.dot(a_ref[...], b_ref[...], preferred_element_type=jnp.float32)
    idx = 2
    if has_bias:
        acc = acc + refs[idx][...]
        idx += 1
    if has_res:
        acc = acc + refs[idx][...]
        idx += 1
    o_ref[...] = acc.astype(o_ref.dtype)


def fused_matmul(a, b, bias=None, residual=None, out_dtype=jnp.float32, tm=256):
    # a: (M, K), b: (K, N). bf16 MXU operands, f32 accumulation.
    # NOTE: order is (a@b) + bias + residual; any scaling must be pre-folded into a/b.
    M, K = a.shape
    _, N = b.shape
    tm = min(tm, _round_up(M, 8))
    Mpad = _round_up(M, tm)
    grid_m = Mpad // tm

    a_p = a.astype(jnp.bfloat16)
    if Mpad != M:
        a_p = jnp.pad(a_p, ((0, Mpad - M), (0, 0)))
    inputs = [a_p, b.astype(jnp.bfloat16)]
    in_specs = [pl.BlockSpec((tm, K), lambda i: (i, 0)),
                pl.BlockSpec((K, N), lambda i: (0, 0))]
    blk_bytes = tm * K * 2 + K * N * 2 + tm * N * jnp.dtype(out_dtype).itemsize
    if bias is not None:
        inputs.append(bias.reshape(1, N).astype(jnp.float32))
        in_specs.append(pl.BlockSpec((1, N), lambda i: (0, 0)))
        blk_bytes += N * 4
    if residual is not None:
        r = residual.astype(jnp.float32)
        if Mpad != M:
            r = jnp.pad(r, ((0, Mpad - M), (0, 0)))
        inputs.append(r)
        in_specs.append(pl.BlockSpec((tm, N), lambda i: (i, 0)))
        blk_bytes += tm * N * 4

    kernel = functools.partial(_mm_kernel, has_bias=bias is not None,
                               has_res=residual is not None)
    # explicit VMEM budget: double-buffered blocks + headroom; capped for v7x (64 MiB)
    vmem_limit = min(max(4 * blk_bytes, 16 << 20), 64 << 20)
    out = pl.pallas_call(
        kernel,
        out_shape=jax.ShapeDtypeStruct((Mpad, N), out_dtype),
        grid=(grid_m,),
        in_specs=in_specs,
        out_specs=pl.BlockSpec((tm, N), lambda i: (i, 0)),
        compiler_params=pltpu.CompilerParams(
            dimension_semantics=("parallel",),
            vmem_limit_bytes=vmem_limit),
    )(*inputs)
    return out if Mpad == M else out[:M]


# ----------------------------------------------------------------------------
# 3x3 same-conv as im2col + one matmul (batch folded into M, K = 9*C).
# NOTE: CT2's convs run on the token grid (H/ps x W/ps) and the fixed 22x22 colour
# grid, never the full image, so the im2col blow-up is <= ~2 MiB here.
# ----------------------------------------------------------------------------
def _im2col_3x3(x_nhwc):
    B, H, W, C = x_nhwc.shape
    xp = jnp.pad(x_nhwc, ((0, 0), (1, 1), (1, 1), (0, 0)))
    cols = [xp[:, dy:dy + H, dx:dx + W, :] for dy in range(3) for dx in range(3)]
    patches = jnp.concatenate(cols, axis=-1)            # (B, H, W, 9C)
    return patches.reshape(B * H * W, 9 * C)


def conv3x3_im2col(x_nhwc, w2d_bf16, bias, residual=None, out_dtype=jnp.float32):
    patches = _im2col_3x3(x_nhwc.astype(jnp.bfloat16))
    return fused_matmul(patches, w2d_bf16, bias=bias, residual=residual,
                        out_dtype=out_dtype)


# ----------------------------------------------------------------------------
# encode(): k-nearest gaussian soft labels + fused class-weight gather
# ----------------------------------------------------------------------------
def _encode_kernel(qaug_ref, cw_ref, ab_ref, q_ref, w_ref, *, sigma, neighbours):
    # qaug_ref: (binsp, 8) = [-2a_q, -2b_q, |q|^2, 0...]   (padded bins are far away)
    # cw_ref:   (binsp, 1) class weights (0 for padded bins)
    # ab_ref:   (8, tn)    = [a; b; 1; 0...]
    # q_ref:    (binsp, tn) soft labels out
    # w_ref:    (1, tn)     class weight of the nearest bin (argmax of soft label)
    ab = ab_ref[...]
    p2 = ab[0:1, :] * ab[0:1, :] + ab[1:2, :] * ab[1:2, :]          # (1, tn)
    # squared cdist on the MXU: |q|^2 - 2 q.p via the augmented matmul, + |p|^2
    d2 = jnp.dot(qaug_ref[...], ab, preferred_element_type=jnp.float32) + p2

    big = jnp.float32(1e30)
    d2_work = d2
    # k-nearest via repeated min + knock-out; selection mask recovered at the end
    # from the knocked-out entries (exact-tie pixels may select one extra bin vs
    # torch argsort; measure-zero for continuous ab).
    dmin0 = None
    for it in range(neighbours):
        dmin = jnp.min(d2_work, axis=0, keepdims=True)              # (1, tn)
        if it == 0:
            dmin0 = dmin
        d2_work = jnp.where(d2_work <= dmin, big, d2_work)

    selected = d2_work >= jnp.float32(1e29)                         # (binsp, tn)
    inv2s2 = jnp.float32(1.0 / (2.0 * sigma * sigma))
    # the 1/(2*pi*sigma) gaussian norm cancels after the wsum normalization -> dropped
    g = jnp.exp(-d2 * inv2s2)
    q_sel = jnp.where(selected, g, 0.0)
    wsum = jnp.sum(q_sel, axis=0, keepdims=True)                    # (1, tn)
    q_ref[...] = (q_sel * pl.reciprocal(wsum, approx=True)).astype(q_ref.dtype)

    # fused GetClassWeights: argmax(soft label) == argmin(d2) == the bin(s) knocked
    # out in iteration 0 -> gather their class weight (summed over exact ties).
    w_ref[...] = jnp.sum(jnp.where(d2 <= dmin0, cw_ref[...], 0.0),
                         axis=0, keepdims=True)


def encode_q2d(img_ab, q_ab, class_weights, sigma, neighbours, bins, tile_n=1024):
    # returns (soft labels (bins, B*H*W), per-pixel class weights (1, B*H*W)),
    # pixel order (b, h, w)
    B, _, H, W = img_ab.shape
    N = B * H * W
    binsp = _round_up(bins, 8)                      # 313 -> 320 (full sublane vregs)

    iab = jnp.transpose(img_ab, (1, 0, 2, 3)).reshape(2, N).astype(jnp.float32)
    n_tiles = pl.cdiv(N, tile_n)
    Npad = n_tiles * tile_n
    if Npad != N:
        iab = jnp.pad(iab, ((0, 0), (0, Npad - N)))
    iab_aug = jnp.concatenate(
        [iab, jnp.ones((1, Npad), jnp.float32), jnp.zeros((5, Npad), jnp.float32)],
        axis=0)                                                      # (8, Npad)

    qab = q_ab.astype(jnp.float32)
    # pad the gamut with far-away points so padded bins are never nearest / selected
    qab_p = jnp.pad(qab, ((0, binsp - bins), (0, 0)), constant_values=1e4)
    qn2 = jnp.sum(qab_p * qab_p, axis=1, keepdims=True)              # (binsp, 1)
    qaug = jnp.concatenate(
        [-2.0 * qab_p, qn2, jnp.zeros((binsp, 5), jnp.float32)], axis=1)   # (binsp, 8)
    cw = jnp.pad(class_weights.reshape(bins, 1).astype(jnp.float32),
                 ((0, binsp - bins), (0, 0)))

    q, w = pl.pallas_call(
        functools.partial(_encode_kernel, sigma=sigma, neighbours=neighbours),
        out_shape=(jax.ShapeDtypeStruct((binsp, Npad), jnp.float32),
                   jax.ShapeDtypeStruct((1, Npad), jnp.float32)),
        grid=(n_tiles,),
        in_specs=[pl.BlockSpec((binsp, 8), lambda i: (0, 0)),
                  pl.BlockSpec((binsp, 1), lambda i: (0, 0)),
                  pl.BlockSpec((8, tile_n), lambda i: (0, i))],
        out_specs=(pl.BlockSpec((binsp, tile_n), lambda i: (0, i)),
                   pl.BlockSpec((1, tile_n), lambda i: (0, i))),
        compiler_params=pltpu.CompilerParams(
            dimension_semantics=("parallel",),
            vmem_limit_bytes=32 << 20),
    )(qaug, cw, iab_aug)
    return q[:bins, :N], w[:, :N]


# ----------------------------------------------------------------------------
# AnnealedMeanDecodeQ on the pre-repeat, lane-padded scores (row-wise op)
# ----------------------------------------------------------------------------
def _decode_q_kernel(q_ref, qab_aug_ref, o_ref, *, inv_T):
    # q_ref: (N, Qpad) logits (padded cols have zero weight), qab_aug_ref: (3, Qpad)
    q = q_ref[...]
    m = jnp.max(q, axis=-1, keepdims=True)                # numerically stable softmax
    z = jnp.exp((q - m) * jnp.float32(inv_T))             # (N, Qpad)
    nd = jax.lax.dot_general(qab_aug_ref[...], z,
                             dimension_numbers=(((1,), (1,)), ((), ())),
                             preferred_element_type=jnp.float32)   # (3, N)
    # approx reciprocal: output only feeds the detached final_img visualization
    o_ref[...] = nd[0:2, :] * pl.reciprocal(nd[2:3, :], approx=True)


def annealed_mean_decode_2d(scores_pad, q_ab, bins, T):
    # scores_pad: (N, Qpad) padded logits -> (2, N) expected ab (lane-dense output)
    N, Qpad = scores_pad.shape
    qab_t = jnp.transpose(q_ab.astype(jnp.float32))                           # (2, bins)
    qab_aug = jnp.concatenate([qab_t, jnp.ones((1, bins), jnp.float32)], axis=0)
    qab_aug = jnp.pad(qab_aug, ((0, 0), (0, Qpad - bins)))                    # (3, Qpad)
    return pl.pallas_call(
        functools.partial(_decode_q_kernel, inv_T=float(1.0 / T)),
        out_shape=jax.ShapeDtypeStruct((2, N), jnp.float32),
        grid=(1,),
        in_specs=[pl.BlockSpec((N, Qpad), lambda i: (0, 0)),
                  pl.BlockSpec((3, Qpad), lambda i: (0, 0))],
        out_specs=pl.BlockSpec((2, N), lambda i: (0, 0)),
    )(scores_pad.astype(jnp.float32), qab_aug)


# ----------------------------------------------------------------------------
# RebalanceLoss: identity forward, weight-scaled backward (matches autograd.Function)
# ----------------------------------------------------------------------------
@jax.custom_vjp
def rebalance_loss(data_input, weights):
    return data_input


def _rebalance_fwd(data_input, weights):
    return data_input, weights


def _rebalance_bwd(weights, g):
    return (g * weights, jnp.zeros_like(weights))


rebalance_loss.defvjp(_rebalance_fwd, _rebalance_bwd)


# ----------------------------------------------------------------------------
# CT2 model (deterministic synthetic parameters)
# ----------------------------------------------------------------------------
class CT2Pallas:
    def __init__(self, key, *, height=32, width=32, patch_size=16, dim=128,
                 neighbours=5, num_quantized=313, sigma=5.0, T=0.38):
        self.H, self.W, self.ps, self.dim = height, width, patch_size, dim
        self.Hp, self.Wp = height // patch_size, width // patch_size
        self.bins, self.neighbours, self.sigma, self.T = num_quantized, neighbours, sigma, T
        self.bins_lane = _round_up(num_quantized, 128)    # 313 -> 384 (lane-dense)

        # synthetic quantized ab gamut: first 313 points of the 22x22 grid in [-110, 100]
        grid_vals = jnp.arange(22, dtype=jnp.float32) * 10.0 - 110.0
        aa, bb = jnp.meshgrid(grid_vals, grid_vals, indexing="ij")
        full = jnp.stack([aa.reshape(-1), bb.reshape(-1)], axis=-1)          # (484, 2)
        self.q_ab = full[:num_quantized]                                     # (313, 2)
        new_ab = jnp.floor((self.q_ab + 110.0) / 10.0).astype(jnp.int32)
        self.color_y, self.color_x = new_ab[:, 0], new_ab[:, 1]

        # GetClassWeights (lambda_=0.5) with a synthetic deterministic prior
        prior = jnp.exp(-(self.q_ab[:, 0] ** 2 + self.q_ab[:, 1] ** 2) / (2 * 60.0 ** 2))
        prior = prior / jnp.sum(prior)
        uniform = jnp.full((num_quantized,), 1.0 / num_quantized, jnp.float32)
        w = 1.0 / (0.5 * prior + 0.5 * uniform)
        self.class_weights = w / jnp.sum(prior * w)

        ks = jax.random.split(key, 10)
        s = 0.02
        self.colors_tokens = jax.random.normal(ks[0], (1, num_quantized, dim), jnp.float32)
        cpn_w = s * jax.random.normal(ks[1], (3, 3, dim, dim), jnp.float32)
        self.cpn_b = s * jax.random.normal(ks[2], (dim,), jnp.float32)
        ccpn_w = s * jax.random.normal(ks[3], (3, 3, dim, dim), jnp.float32)
        self.ccpn_b = s * jax.random.normal(ks[4], (dim,), jnp.float32)
        enc_w = s * jax.random.normal(ks[5], (3 * patch_size * patch_size, dim), jnp.float32)
        self.enc_b = s * jax.random.normal(ks[6], (dim,), jnp.float32)
        self.cls = s * jax.random.normal(ks[7], (1, 1, dim), jnp.float32)
        dec_ab_w = s * jax.random.normal(ks[8], (dim, 2 * patch_size * patch_size), jnp.float32)
        self.dec_ab_b = s * jax.random.normal(ks[9], (2 * patch_size * patch_size,), jnp.float32)

        # pre-cast MXU operands to bf16 once (f32 accumulation inside the kernels)
        self.cpn_w2d = cpn_w.reshape(9 * dim, dim).astype(jnp.bfloat16)       # (9C, C), HWIO order
        self.ccpn_w2d = ccpn_w.reshape(9 * dim, dim).astype(jnp.bfloat16)
        self.enc_w = enc_w.astype(jnp.bfloat16)
        self.dec_ab_w = dec_ab_w.astype(jnp.bfloat16)

    # --- stand-in ViT encoder: patchify + fused linear projection + CLS token ---
    def encoder(self, img):
        B = img.shape[0]
        ps, hp, wp = self.ps, self.Hp, self.Wp
        x = img.reshape(B, 3, hp, ps, wp, ps)
        x = jnp.transpose(x, (0, 2, 4, 1, 3, 5)).reshape(B * hp * wp, 3 * ps * ps)
        tok = fused_matmul(x, self.enc_w, bias=self.enc_b)      # f32: residual of Cpn
        tok = tok.reshape(B, hp * wp, self.dim)
        cls = jnp.broadcast_to(self.cls, (B, 1, self.dim))
        return jnp.concatenate([cls, tok], axis=1)

    # --- CondPositional (color=None): grid reshape, im2col conv, fused residual ---
    def cpn(self, tokens):
        B, Np, C = tokens.shape
        x = tokens.reshape(B, self.Hp, self.Wp, C)
        # bf16 output: it only feeds the next MXU call (decoder), halves HBM traffic
        y2d = conv3x3_im2col(x, self.cpn_w2d, self.cpn_b,
                             residual=tokens.reshape(B * Np, C),
                             out_dtype=jnp.bfloat16)            # (B*Np, C)
        return y2d

    # --- CondPositional (color=q_ab): scatter onto 22x22 grid, conv (B=1), gather ---
    def color_cpn(self, h=22, w=22):
        # colors_tokens are identical across batch; conv is batch-independent -> run once.
        C = self.dim
        tokens0 = self.colors_tokens[0]                                       # (bins, C)
        feat = jnp.zeros((1, h, w, C), jnp.float32).at[0, self.color_y, self.color_x, :].set(tokens0)
        y2d = conv3x3_im2col(feat, self.ccpn_w2d, self.ccpn_b)                # (h*w, C)
        pos = y2d.reshape(h, w, C)[self.color_y, self.color_x, :]             # (bins, C)
        return pos + tokens0                                                  # (bins, C)

    # --- stand-in decoder: ONE fused matmul for cross-attn scores + ab head ---
    def decoder(self, enc2d, colors, mask):
        # TODO(synk): mask is unused by this stand-in decoder (real CT2 uses it in attention).
        B = enc2d.shape[0] // (self.Hp * self.Wp)
        hp, wp, ps, C = self.Hp, self.Wp, self.ps, self.dim
        bins, binsl = self.bins, self.bins_lane

        # fused weight:  cols [0,bins)      scores (1/sqrt(C) folded into W)
        #                cols [bins,binsl)  zero pad (lane-dense + decode padding)
        #                cols [binsl, ...)  per-patch ab head
        w_scores = jnp.transpose(colors) * jnp.float32(1.0 / math.sqrt(C))   # (C, bins)
        w_scores = jnp.pad(w_scores, ((0, 0), (0, binsl - bins)))
        w_fused = jnp.concatenate([w_scores.astype(jnp.bfloat16), self.dec_ab_w], axis=1)
        b_fused = jnp.concatenate([jnp.zeros((binsl,), jnp.float32), self.dec_ab_b])

        out = fused_matmul(enc2d, w_fused, bias=b_fused)         # (B*Np, binsl + 2*ps*ps)
        scores_pad = out[:, :binsl]                              # (B*Np, 384) zero-padded
        scores_2d = scores_pad[:, :bins]                         # (B*Np, 313)
        ab = out[:, binsl:]                                      # (B*Np, 2*ps*ps)

        s = jnp.transpose(scores_2d.reshape(B, hp, wp, bins), (0, 3, 1, 2))
        pred_q = _patch_upsample(s, ps)                          # (B, bins, H, W)
        ab = ab.reshape(B, hp, wp, 2, ps, ps)
        out_ab = jnp.transpose(ab, (0, 3, 1, 4, 2, 5)).reshape(B, 2, hp * ps, wp * ps)
        return pred_q, scores_pad, out_ab

    def forward(self, img_L, img_ab, mask, training=False):
        if img_L.shape[1] == 1:
            img = jnp.repeat(img_L, 3, axis=1)
        else:
            img = img_L
        img = (img - 50.0) / 100.0                               # normalize

        B = img.shape[0]
        hp, wp, ps = self.Hp, self.Wp, self.ps

        enc = self.encoder(img)[:, 1:, :]                        # drop CLS
        enc2d = self.cpn(enc)                                    # (B*Np, dim) bf16

        colors = self.color_cpn(22, 22)                          # (bins, dim)

        pred_q, scores_pad, out_ab = self.decoder(enc2d, colors, mask)

        soft_labels = None
        w2d = None
        if img_ab is not None:
            q2d, w2d = encode_q2d(img_ab, self.q_ab, self.class_weights,
                                  self.sigma, self.neighbours, self.bins)
            soft_labels = jnp.transpose(q2d.reshape(self.bins, B, self.H, self.W),
                                        (1, 0, 2, 3))

        if training:
            color_weights = w2d.reshape(B, self.H, self.W)[:, None, :, :]   # (B,1,H,W)
            pred_q = rebalance_loss(pred_q, color_weights)                  # identity fwd

        # decode on the pre-repeat padded scores (row-wise op => identical to decoding
        # pred_q), then upsample the (B, 2, hp, wp) result.
        ab_small = annealed_mean_decode_2d(scores_pad, self.q_ab, self.bins, self.T)
        ab_small = jnp.transpose(ab_small).reshape(B, hp, wp, 2)
        ab_small = jnp.transpose(ab_small, (0, 3, 1, 2))                    # (B,2,hp,wp)
        pred_ab = _patch_upsample(ab_small, ps)                             # (B,2,H,W)

        final_img = jnp.concatenate([img_L, jax.lax.stop_gradient(pred_ab)], axis=1)
        return pred_q, soft_labels, out_ab, final_img


# ----------------------------------------------------------------------------
if __name__ == "__main__":
    key = jax.random.PRNGKey(0)
    k_model, k_l, k_ab = jax.random.split(key, 3)

    B, H, W = 2, 32, 32
    model = CT2Pallas(k_model, height=H, width=W, patch_size=16, dim=128,
                      neighbours=5, num_quantized=313, sigma=5.0, T=0.38)

    img_L = 100.0 * jax.random.uniform(k_l, (B, 1, H, W), jnp.float32)          # L in [0, 100]
    img_ab = jax.random.uniform(k_ab, (B, 2, H, W), jnp.float32,
                                minval=-110.0, maxval=100.0)                     # continuous ab
    mask = jnp.ones((B, model.Hp * model.Wp, model.bins), jnp.float32)

    pred_q, soft_labels, out_ab, final_img = model.forward(img_L, img_ab, mask, training=True)
    jax.block_until_ready((pred_q, soft_labels, out_ab, final_img))

    assert pred_q.shape == (B, 313, H, W)
    assert soft_labels.shape == (B, 313, H, W)
    assert out_ab.shape == (B, 2, H, W)
    assert final_img.shape == (B, 3, H, W)
    print("KERNEL_OK")
</pallas_src>

<mosaic_0001>
module attributes {stable_mosaic.version = 11 : i64} {
  func.func @_mm_kernel(%arg0: i32, %arg1: memref<8x768xbf16, #tpu.memory_space<vmem>>, %arg2: memref<768x128xbf16, #tpu.memory_space<vmem>>, %arg3: memref<1x128xf32, #tpu.memory_space<vmem>>, %arg4: memref<8x128xf32, #tpu.memory_space<vmem>>) attributes {dimension_semantics = [#tpu.dimension_semantics<parallel>], iteration_bounds = array<i64: 1>, scalar_prefetch = 0 : i64, scratch_operands = 0 : i64, tpu.core_type = #tpu.core_type<tc>, window_params = [{transform_indices = @transform_0, window_bounds = array<i64: 8, 768>}, {pipeline_mode = #tpu.pipeline_mode<synchronous>, transform_indices = @transform_1, window_bounds = array<i64: 768, 128>}, {pipeline_mode = #tpu.pipeline_mode<synchronous>, transform_indices = @transform_2, window_bounds = array<i64: 1, 128>}, {transform_indices = @transform_3, window_bounds = array<i64: 8, 128>}]} {
    %c0 = arith.constant 0 : index
    %c0_0 = arith.constant 0 : index
    %0 = vector.load %arg1[%c0, %c0_0] : memref<8x768xbf16, #tpu.memory_space<vmem>>, vector<8x768xbf16>
    %c0_1 = arith.constant 0 : index
    %c0_2 = arith.constant 0 : index
    %1 = vector.load %arg2[%c0_1, %c0_2] : memref<768x128xbf16, #tpu.memory_space<vmem>>, vector<768x128xbf16>
    %cst = arith.constant dense<0.000000e+00> : vector<8x128xf32>
    %2 = tpu.matmul %0, %1, %cst {dimension_numbers = #tpu.dot_dimension_numbers<[1], [0], [0], [1], [0, 0, 1, 1], [], []>} : vector<8x768xbf16>, vector<768x128xbf16>, vector<8x128xf32> -> vector<8x128xf32>
    %c0_3 = arith.constant 0 : index
    %c0_4 = arith.constant 0 : index
    %3 = vector.load %arg3[%c0_3, %c0_4] : memref<1x128xf32, #tpu.memory_space<vmem>>, vector<1x128xf32>
    %4 = vector.broadcast %3 : vector<1x128xf32> to vector<8x128xf32>
    %5 = arith.addf %2, %4 : vector<8x128xf32>
    %c0_5 = arith.constant 0 : index
    %c0_6 = arith.constant 0 : index
    %6 = vector.load %arg4[%c0_5, %c0_6] : memref<8x128xf32, #tpu.memory_space<vmem>>, vector<8x128xf32>
    tpu.vector_store %arg4[%c0_5, %c0_6], %5 {strides = array<i32>} : memref<8x128xf32, #tpu.memory_space<vmem>>, vector<8x128xf32>,
    return
  }
  func.func @transform_0(%arg0: i32) -> (i32, i32) {
    %c0_i32 = arith.constant 0 : i32
    %c0_i32_0 = arith.constant 0 : i32
    return %arg0, %c0_i32 : i32, i32
  }
  func.func @transform_1(%arg0: i32) -> (i32, i32) {
    %c0_i32 = arith.constant 0 : i32
    %c0_i32_0 = arith.constant 0 : i32
    %c0_i32_1 = arith.constant 0 : i32
    return %c0_i32, %c0_i32_0 : i32, i32
  }
  func.func @transform_2(%arg0: i32) -> (i32, i32) {
    %c0_i32 = arith.constant 0 : i32
    %c0_i32_0 = arith.constant 0 : i32
    %c0_i32_1 = arith.constant 0 : i32
    return %c0_i32, %c0_i32_0 : i32, i32
  }
  func.func @transform_3(%arg0: i32) -> (i32, i32) {
    %c0_i32 = arith.constant 0 : i32
    %c0_i32_0 = arith.constant 0 : i32
    return %arg0, %c0_i32 : i32, i32
  }
}

</mosaic_0001>

<llo_original>
// kernel: tpu_custom_call.1
$region0: #{tpu_custom_call.1}
  #allocation0 [shape = 'u32[]', space=smem, size = 0x4, offset = 0x4, fixed_abs, tag = 'smem constant byte address 0x4 - core index']
  #allocation1 [shape = 'u32[72,128]{1,0:T(1,128)}', space=vmem, size = 0x9000, scoped, tag = 'internal scratch']
  %s0 = inlined_call_operand.hbm [shape: bf16[8,768], index: 0, kind: input, shape index: {}]
  %s1 = inlined_call_operand.hbm [shape: bf16[768,128], index: 1, kind: input, shape index: {}]
  %s2 = inlined_call_operand.vmem [shape: f32[1,128], index: 2, kind: input, shape index: {}]
  %s3 = inlined_call_operand.hbm [shape: f32[8,128], index: 3, kind: output, shape index: {}]
  %s4 = sld [smem:[#allocation0]]
  $region30: #{tpu_custom_call.1} parent=0
    _
  %s6 = ssub.s32 1, %s4
  %s7 = scalar_select 0, %s6, %s4
  $region1: #{tpu_custom_call.1} parent=0
    #allocation2 [shape = 'u8[12288]{0}', space=vmem, size = 0x3000, scoped, tag = 'input window, operand 0, single buffered']
    #allocation3 [shape = 's32[1]{0}', space=sflag, size = 0x4, scoped, tag = 'scoped memory for tpu_custom_call.1']
    #allocation4 [shape = 's32[1]{0}', space=sflag, size = 0x4, scoped, tag = 'scoped memory for tpu_custom_call.1']
    #allocation5 [shape = 'u8[196608]{0}', space=vmem, size = 0x30000, scoped, tag = 'input window, operand 1, single buffered']
    #allocation6 [shape = 's32[1]{0}', space=sflag, size = 0x4, scoped, tag = 'scoped memory for tpu_custom_call.1']
    #allocation7 [shape = 'u8[4096]{0}', space=vmem, size = 0x1000, scoped, tag = 'output window, operand 0, single buffered']
    %8 = vsyncpa [#allocation3], 0
    %9 = vsyncpa [#allocation6], 0
    %10 = vsyncpa [#allocation4], 0
    // Predicated region
    $region2: #{tpu_custom_call.1} parent=1 // pred_check
      _
    $region3: #{tpu_custom_call.1} parent=1 // pred_check_branch
      %12 = sbr.rel (0) target = $region5
    $region4: #{tpu_custom_call.1} parent=1 // pred_region
      %14 = vsyncadd [#allocation3], 0
      %s16 = sshll.u32 %s0, 4
      %s17 = int_to_ptr.hbm [resolvable:$true] %s16
      %s18 = sshll.u32 [#allocation2], 4
      %s19 = int_to_ptr.vmem [resolvable:$true] %s18
      %21 = dma.hbm_to_vmem [thread:$0]  %s17, 384, %s19, [#allocation3]
    $region5: #{tpu_custom_call.1} parent=1 // pred_fallthru
      _
    // Predicated region
    $region6: #{tpu_custom_call.1} parent=1 // pred_check
      _
    $region7: #{tpu_custom_call.1} parent=1 // pred_check_branch
      %23 = sbr.rel (0) target = $region9
    $region8: #{tpu_custom_call.1} parent=1 // pred_region
      %25 = vsyncadd [#allocation6], 0
      %s26 = sshll.u32 %s1, 4
      %s27 = int_to_ptr.hbm [resolvable:$true] %s26
      %s28 = sshll.u32 [#allocation5], 4
      %s29 = int_to_ptr.vmem [resolvable:$true] %s28
      %34 = dma.hbm_to_vmem [thread:$0]  %s27, 6144, %s29, [#allocation6], 64, 64, 4
    $region9: #{tpu_custom_call.1} parent=1 // pred_fallthru
      _
    // Predicated region
    $region10: #{tpu_custom_call.1} parent=1 // pred_check
      _
    $region11: #{tpu_custom_call.1} parent=1 // pred_check_branch
      %36 = sbr.rel (0) target = $region13
    $region12: #{tpu_custom_call.1} parent=1 // pred_region
      _
    $region13: #{tpu_custom_call.1} parent=1 // pred_fallthru
      _
    // Predicated region
    $region14: #{tpu_custom_call.1} parent=1 // pred_check
      _
    $region15: #{tpu_custom_call.1} parent=1 // pred_check_branch
      %38 = sbr.rel (0) target = $region17
    $region16: #{tpu_custom_call.1} parent=1 // pred_region
      %40 = dma.done [#allocation3], 384
    $region17: #{tpu_custom_call.1} parent=1 // pred_fallthru
      _
    // Predicated region
    $region18: #{tpu_custom_call.1} parent=1 // pred_check
      _
    $region19: #{tpu_custom_call.1} parent=1 // pred_check_branch
      %42 = sbr.rel (0) target = $region21
    $region20: #{tpu_custom_call.1} parent=1 // pred_region
      %44 = dma.done [#allocation6], 6144
    $region21: #{tpu_custom_call.1} parent=1 // pred_fallthru
      _
    %v45 = vld [vmem:[#allocation2] sm:$0xff]
    %v46 = vld [vmem:[#allocation2 + $0x8] sm:$0xff]
    %v47 = vld [vmem:[#allocation2 + $0x10] sm:$0xff]
    %v48 = vld [vmem:[#allocation5] sm:$0xf]
    %v49 = vld [vmem:[#allocation5 + $0x4] sm:$0xf]
    %v50 = vld [vmem:[#allocation5 + $0x8] sm:$0xf]
    %v51 = vld [vmem:[#allocation5 + $0xc] sm:$0xf]
    %v52 = vld [vmem:[#allocation5 + $0x10] sm:$0xf]
    %v53 = vld [vmem:[#allocation5 + $0x14] sm:$0xf]
    %v54 = vld [vmem:[#allocation5 + $0x18] sm:$0xf]
    %v55 = vld [vmem:[#allocation5 + $0x1c] sm:$0xf]
    %v56 = vld [vmem:[#allocation5 + $0x20] sm:$0xf]
    %v57 = vld [vmem:[#allocation5 + $0x24] sm:$0xf]
    %v58 = vld [vmem:[#allocation5 + $0x28] sm:$0xf]
    %v59 = vld [vmem:[#allocation5 + $0x2c] sm:$0xf]
    %v60 = vld [vmem:[#allocation5 + $0x30] sm:$0xf]
    %v61 = vld [vmem:[#allocation5 + $0x34] sm:$0xf]
    %v62 = vld [vmem:[#allocation5 + $0x38] sm:$0xf]
    %v63 = vld [vmem:[#allocation5 + $0x3c] sm:$0xf]
    %v64 = vld [vmem:[#allocation5 + $0x40] sm:$0xf]
    %v65 = vld [vmem:[#allocation5 + $0x44] sm:$0xf]
    %v66 = vld [vmem:[#allocation5 + $0x48] sm:$0xf]
    %v67 = vld [vmem:[#allocation5 + $0x4c] sm:$0xf]
    %v68 = vld [vmem:[#allocation5 + $0x50] sm:$0xf]
    %v69 = vld [vmem:[#allocation5 + $0x54] sm:$0xf]
    %v70 = vld [vmem:[#allocation5 + $0x58] sm:$0xf]
    %v71 = vld [vmem:[#allocation5 + $0x5c] sm:$0xf]
    %v72 = vld [vmem:[#allocation5 + $0x60] sm:$0xf]
    %v73 = vld [vmem:[#allocation5 + $0x64] sm:$0xf]
    %v74 = vld [vmem:[#allocation5 + $0x68] sm:$0xf]
    %v75 = vld [vmem:[#allocation5 + $0x6c] sm:$0xf]
    %v76 = vld [vmem:[#allocation5 + $0x70] sm:$0xf]
    %v77 = vld [vmem:[#allocation5 + $0x74] sm:$0xf]
    %v78 = vld [vmem:[#allocation5 + $0x78] sm:$0xf]
    %v79 = vld [vmem:[#allocation5 + $0x7c] sm:$0xf]
    %v80 = vld [vmem:[#allocation5 + $0x80] sm:$0xf]
    %v81 = vld [vmem:[#allocation5 + $0x84] sm:$0xf]
    %v82 = vld [vmem:[#allocation5 + $0x88] sm:$0xf]
    %v83 = vld [vmem:[#allocation5 + $0x8c] sm:$0xf]
    %v84 = vld [vmem:[#allocation5 + $0x90] sm:$0xf]
    %v85 = vld [vmem:[#allocation5 + $0x94] sm:$0xf]
    %v86 = vld [vmem:[#allocation5 + $0x98] sm:$0xf]
    %v87 = vld [vmem:[#allocation5 + $0x9c] sm:$0xf]
    %v88 = vld [vmem:[#allocation5 + $0xa0] sm:$0xf]
    %v89 = vld [vmem:[#allocation5 + $0xa4] sm:$0xf]
    %v90 = vld [vmem:[#allocation5 + $0xa8] sm:$0xf]
    %v91 = vld [vmem:[#allocation5 + $0xac] sm:$0xf]
    %v92 = vld [vmem:[#allocation5 + $0xb0] sm:$0xf]
    %v93 = vld [vmem:[#allocation5 + $0xb4] sm:$0xf]
    %v94 = vld [vmem:[#allocation5 + $0xb8] sm:$0xf]
    %v95 = vld [vmem:[#allocation5 + $0xbc] sm:$0xf]
    %v96 = vld [vmem:[#allocation5 + $0xc0] sm:$0xf]
    %v97 = vld [vmem:[#allocation5 + $0xc4] sm:$0xf]
    %v98 = vld [vmem:[#allocation5 + $0xc8] sm:$0xf]
    %v99 = vld [vmem:[#allocation5 + $0xcc] sm:$0xf]
    %v100 = vld [vmem:[#allocation5 + $0xd0] sm:$0xf]
    %v101 = vld [vmem:[#allocation5 + $0xd4] sm:$0xf]
    %v102 = vld [vmem:[#allocation5 + $0xd8] sm:$0xf]
    %v103 = vld [vmem:[#allocation5 + $0xdc] sm:$0xf]
    %v104 = vld [vmem:[#allocation5 + $0xe0] sm:$0xf]
    %v105 = vld [vmem:[#allocation5 + $0xe4] sm:$0xf]
    %v106 = vld [vmem:[#allocation5 + $0xe8] sm:$0xf]
    %v107 = vld [vmem:[#allocation5 + $0xec] sm:$0xf]
    %v108 = vld [vmem:[#allocation5 + $0xf0] sm:$0xf]
    %v109 = vld [vmem:[#allocation5 + $0xf4] sm:$0xf]
    %v110 = vld [vmem:[#allocation5 + $0xf8] sm:$0xf]
    %v111 = vld [vmem:[#allocation5 + $0xfc] sm:$0xf]
    %v112 = vld [vmem:[#allocation5 + $0x100] sm:$0xf]
    %v113 = vld [vmem:[#allocation5 + $0x104] sm:$0xf]
    %v114 = vld [vmem:[#allocation5 + $0x108] sm:$0xf]
    %v115 = vld [vmem:[#allocation5 + $0x10c] sm:$0xf]
    %v116 = vld [vmem:[#allocation5 + $0x110] sm:$0xf]
    %v117 = vld [vmem:[#allocation5 + $0x114] sm:$0xf]
    %v118 = vld [vmem:[#allocation5 + $0x118] sm:$0xf]
    %v119 = vld [vmem:[#allocation5 + $0x11c] sm:$0xf]
    %v120 = vld [vmem:[#allocation5 + $0x120] sm:$0xf]
    %v121 = vld [vmem:[#allocation5 + $0x124] sm:$0xf]
    %v122 = vld [vmem:[#allocation5 + $0x128] sm:$0xf]
    %v123 = vld [vmem:[#allocation5 + $0x12c] sm:$0xf]
    %v124 = vld [vmem:[#allocation5 + $0x130] sm:$0xf]
    %v125 = vld [vmem:[#allocation5 + $0x134] sm:$0xf]
    %v126 = vld [vmem:[#allocation5 + $0x138] sm:$0xf]
    %v127 = vld [vmem:[#allocation5 + $0x13c] sm:$0xf]
    %v128 = vld [vmem:[#allocation5 + $0x140] sm:$0xf]
    %v129 = vld [vmem:[#allocation5 + $0x144] sm:$0xf]
    %v130 = vld [vmem:[#allocation5 + $0x148] sm:$0xf]
    %v131 = vld [vmem:[#allocation5 + $0x14c] sm:$0xf]
    %v132 = vld [vmem:[#allocation5 + $0x150] sm:$0xf]
    %v133 = vld [vmem:[#allocation5 + $0x154] sm:$0xf]
    %v134 = vld [vmem:[#allocation5 + $0x158] sm:$0xf]
    %v135 = vld [vmem:[#allocation5 + $0x15c] sm:$0xf]
    %v136 = vld [vmem:[#allocation5 + $0x160] sm:$0xf]
    %v137 = vld [vmem:[#allocation5 + $0x164] sm:$0xf]
    %v138 = vld [vmem:[#allocation5 + $0x168] sm:$0xf]
    %v139 = vld [vmem:[#allocation5 + $0x16c] sm:$0xf]
    %v140 = vld [vmem:[#allocation5 + $0x170] sm:$0xf]
    %v141 = vld [vmem:[#allocation5 + $0x174] sm:$0xf]
    %v142 = vld [vmem:[#allocation5 + $0x178] sm:$0xf]
    %v143 = vld [vmem:[#allocation5 + $0x17c] sm:$0xf]
    %v144 = vld [vmem:[%s2] sm:$0x1]
    %v146 = vperm.slane %v144, 0
    %v151 = vunpack.c.l.b16 %v45
    %v152 = vunpack.c.h.b16 %v45
    %v153 = vunpack.c.l.b16 %v46
    %v154 = vunpack.c.h.b16 %v46
    %v155 = vunpack.c.l.b16 %v47
    %v156 = vunpack.c.h.b16 %v47
    %v157 = vpack.c.b16 %v151, %v151
    %v158 = vpack.c.b16 %v152, %v152
    %v159 = vpack.c.b16 %v153, %v153
    %v160 = vpack.c.b16 %v154, %v154
    %v161 = vpack.c.b16 %v155, %v155
    %v162 = vpack.c.b16 %v156, %v156
    %v265 = vunpack.c.l.b16 %v48
    %v266 = vunpack.c.l.b16 %v49
    %v267 = vunpack.c.l.b16 %v50
    %v268 = vunpack.c.l.b16 %v51
    %v269 = vunpack.c.l.b16 %v52
    %v270 = vunpack.c.l.b16 %v53
    %v271 = vunpack.c.l.b16 %v54
    %v272 = vunpack.c.l.b16 %v55
    %v273 = vunpack.c.l.b16 %v56
    %v274 = vunpack.c.l.b16 %v57
    %v275 = vunpack.c.l.b16 %v58
    %v276 = vunpack.c.l.b16 %v59
    %v277 = vunpack.c.l.b16 %v60
    %v278 = vunpack.c.l.b16 %v61
    %v279 = vunpack.c.l.b16 %v62
    %v280 = vunpack.c.l.b16 %v63
    %v281 = vunpack.c.l.b16 %v64
    %v282 = vunpack.c.l.b16 %v65
    %v283 = vunpack.c.l.b16 %v66
    %v284 = vunpack.c.l.b16 %v67
    %v285 = vunpack.c.l.b16 %v68
    %v286 = vunpack.c.l.b16 %v69
    %v287 = vunpack.c.l.b16 %v70
    %v288 = vunpack.c.l.b16 %v71
    %v289 = vunpack.c.l.b16 %v72
    %v290 = vunpack.c.l.b16 %v73
    %v291 = vunpack.c.l.b16 %v74
    %v292 = vunpack.c.l.b16 %v75
    %v293 = vunpack.c.l.b16 %v76
    %v294 = vunpack.c.l.b16 %v77
    %v295 = vunpack.c.l.b16 %v78
    %v296 = vunpack.c.l.b16 %v79
    %v297 = vunpack.c.l.b16 %v80
    %v298 = vunpack.c.l.b16 %v81
    %v299 = vunpack.c.l.b16 %v82
    %v300 = vunpack.c.l.b16 %v83
    %v301 = vunpack.c.l.b16 %v84
    %v302 = vunpack.c.l.b16 %v85
    %v303 = vunpack.c.l.b16 %v86
    %v304 = vunpack.c.l.b16 %v87
    %v305 = vunpack.c.l.b16 %v88
    %v306 = vunpack.c.l.b16 %v89
    %v307 = vunpack.c.l.b16 %v90
    %v308 = vunpack.c.l.b16 %v91
    %v309 = vunpack.c.l.b16 %v92
    %v310 = vunpack.c.l.b16 %v93
    %v311 = vunpack.c.l.b16 %v94
    %v312 = vunpack.c.l.b16 %v95
    %v313 = vunpack.c.l.b16 %v96
    %v314 = vunpack.c.l.b16 %v97
    %v315 = vunpack.c.l.b16 %v98
    %v316 = vunpack.c.l.b16 %v99
    %v317 = vunpack.c.l.b16 %v100
    %v318 = vunpack.c.l.b16 %v101
    %v319 = vunpack.c.l.b16 %v102
    %v320 = vunpack.c.l.b16 %v103
    %v321 = vunpack.c.l.b16 %v104
    %v322 = vunpack.c.l.b16 %v105
    %v323 = vunpack.c.l.b16 %v106
    %v324 = vunpack.c.l.b16 %v107
    %v325 = vunpack.c.l.b16 %v108
    %v326 = vunpack.c.l.b16 %v109
    %v327 = vunpack.c.l.b16 %v110
    %v328 = vunpack.c.l.b16 %v111
    %v329 = vunpack.c.l.b16 %v112
    %v330 = vunpack.c.l.b16 %v113
    %v331 = vunpack.c.l.b16 %v114
    %v332 = vunpack.c.l.b16 %v115
    %v333 = vunpack.c.l.b16 %v116
    %v334 = vunpack.c.l.b16 %v117
    %v335 = vunpack.c.l.b16 %v118
    %v336 = vunpack.c.l.b16 %v119
    %v337 = vunpack.c.l.b16 %v120
    %v338 = vunpack.c.l.b16 %v121
    %v339 = vunpack.c.l.b16 %v122
    %v340 = vunpack.c.l.b16 %v123
    %v341 = vunpack.c.l.b16 %v124
    %v342 = vunpack.c.l.b16 %v125
    %v343 = vunpack.c.l.b16 %v126
    %v344 = vunpack.c.l.b16 %v127
    %v345 = vunpack.c.l.b16 %v128
    %v346 = vunpack.c.l.b16 %v129
    %v347 = vunpack.c.l.b16 %v130
    %v348 = vunpack.c.l.b16 %v131
    %v349 = vunpack.c.l.b16 %v132
    %v350 = vunpack.c.l.b16 %v133
    %v351 = vunpack.c.l.b16 %v134
    %v352 = vunpack.c.l.b16 %v135
    %v353 = vunpack.c.l.b16 %v136
    %v354 = vunpack.c.l.b16 %v137
    %v355 = vunpack.c.l.b16 %v138
    %v356 = vunpack.c.l.b16 %v139
    %v357 = vunpack.c.l.b16 %v140
    %v358 = vunpack.c.l.b16 %v141
    %v359 = vunpack.c.l.b16 %v142
    %v360 = vunpack.c.l.b16 %v143
    %v361 = vpack.c.b16 %v266, %v265
    %v362 = vpack.c.b16 %v268, %v267
    %v363 = vpack.c.b16 %v270, %v269
    %v364 = vpack.c.b16 %v272, %v271
    %v365 = vpack.c.b16 %v274, %v273
    %v366 = vpack.c.b16 %v276, %v275
    %v367 = vpack.c.b16 %v278, %v277
    %v368 = vpack.c.b16 %v280, %v279
    %v369 = vpack.c.b16 %v282, %v281
    %v370 = vpack.c.b16 %v284, %v283
    %v371 = vpack.c.b16 %v286, %v285
    %v372 = vpack.c.b16 %v288, %v287
    %v373 = vpack.c.b16 %v290, %v289
    %v374 = vpack.c.b16 %v292, %v291
    %v375 = vpack.c.b16 %v294, %v293
    %v376 = vpack.c.b16 %v296, %v295
    %v377 = vpack.c.b16 %v298, %v297
    %v378 = vpack.c.b16 %v300, %v299
    %v379 = vpack.c.b16 %v302, %v301
    %v380 = vpack.c.b16 %v304, %v303
    %v381 = vpack.c.b16 %v306, %v305
    %v382 = vpack.c.b16 %v308, %v307
    %v383 = vpack.c.b16 %v310, %v309
    %v384 = vpack.c.b16 %v312, %v311
    %v385 = vpack.c.b16 %v314, %v313
    %v386 = vpack.c.b16 %v316, %v315
    %v387 = vpack.c.b16 %v318, %v317
    %v388 = vpack.c.b16 %v320, %v319
    %v389 = vpack.c.b16 %v322, %v321
    %v390 = vpack.c.b16 %v324, %v323
    %v391 = vpack.c.b16 %v326, %v325
    %v392 = vpack.c.b16 %v328, %v327
    %v393 = vpack.c.b16 %v330, %v329
    %v394 = vpack.c.b16 %v332, %v331
    %v395 = vpack.c.b16 %v334, %v333
    %v396 = vpack.c.b16 %v336, %v335
    %v397 = vpack.c.b16 %v338, %v337
    %v398 = vpack.c.b16 %v340, %v339
    %v399 = vpack.c.b16 %v342, %v341
    %v400 = vpack.c.b16 %v344, %v343
    %v401 = vpack.c.b16 %v346, %v345
    %v402 = vpack.c.b16 %v348, %v347
    %v403 = vpack.c.b16 %v350, %v349
    %v404 = vpack.c.b16 %v352, %v351
    %v405 = vpack.c.b16 %v354, %v353
    %v406 = vpack.c.b16 %v356, %v355
    %v407 = vpack.c.b16 %v358, %v357
    %v408 = vpack.c.b16 %v360, %v359
    %457 = vmatpush.bf16.msra.mxu0 %v368
    %458 = vmatpush.bf16.msra.mxu0 %v367
    %459 = vmatpush.bf16.msra.mxu0 %v366
    %460 = vmatpush.bf16.msra.mxu0 %v365
    %461 = vmatpush.bf16.msra.mxu0 %v364
    %462 = vmatpush.bf16.msra.mxu0 %v363
    %463 = vmatpush.bf16.msra.mxu0 %v362
    %464 = vmatpush.bf16.msra.mxu0 %v361
    %465 = vmatmul.bf16.gmra.mxu0 %v157
    %v466 = vpop.f32.mrf.mxu0
    %v467 = vadd.f32 %v146, %v466
    %v468 = vpop.f32.mrf.mxu0
    %469 = vdwg.mxu0
    %470 = vmatpush.bf16.msra.mxu0 %v376
    %471 = vmatpush.bf16.msra.mxu0 %v375
    %472 = vmatpush.bf16.msra.mxu0 %v374
    %473 = vmatpush.bf16.msra.mxu0 %v373
    %474 = vmatpush.bf16.msra.mxu0 %v372
    %475 = vmatpush.bf16.msra.mxu0 %v371
    %476 = vmatpush.bf16.msra.mxu0 %v370
    %477 = vmatpush.bf16.msra.mxu0 %v369
    %478 = vmatmul.bf16.gmra.mxu0 %v158
    %v479 = vpop.f32.mrf.mxu0
    %v480 = vadd.f32 %v467, %v479
    %v481 = vpop.f32.mrf.mxu0
    %482 = vdwg.mxu0
    %483 = vmatpush.bf16.msra.mxu0 %v384
    %484 = vmatpush.bf16.msra.mxu0 %v383
    %485 = vmatpush.bf16.msra.mxu0 %v382
    %486 = vmatpush.bf16.msra.mxu0 %v381
    %487 = vmatpush.bf16.msra.mxu0 %v380
    %488 = vmatpush.bf16.msra.mxu0 %v379
    %489 = vmatpush.bf16.msra.mxu0 %v378
    %490 = vmatpush.bf16.msra.mxu0 %v377
    %491 = vmatmul.bf16.gmra.mxu0 %v159
    %v492 = vpop.f32.mrf.mxu0
    %v493 = vadd.f32 %v480, %v492
    %v494 = vpop.f32.mrf.mxu0
    %495 = vdwg.mxu0
    %496 = vmatpush.bf16.msra.mxu0 %v392
    %497 = vmatpush.bf16.msra.mxu0 %v391
    %498 = vmatpush.bf16.msra.mxu0 %v390
    %499 = vmatpush.bf16.msra.mxu0 %v389
    %500 = vmatpush.bf16.msra.mxu0 %v388
    %501 = vmatpush.bf16.msra.mxu0 %v387
    %502 = vmatpush.bf16.msra.mxu0 %v386
    %503 = vmatpush.bf16.msra.mxu0 %v385
    %504 = vmatmul.bf16.gmra.mxu0 %v160
    %v505 = vpop.f32.mrf.mxu0
    %v506 = vadd.f32 %v493, %v505
    %v507 = vpop.f32.mrf.mxu0
    %508 = vdwg.mxu0
    %509 = vmatpush.bf16.msra.mxu0 %v400
    %510 = vmatpush.bf16.msra.mxu0 %v399
    %511 = vmatpush.bf16.msra.mxu0 %v398
    %512 = vmatpush.bf16.msra.mxu0 %v397
    %513 = vmatpush.bf16.msra.mxu0 %v396
    %514 = vmatpush.bf16.msra.mxu0 %v395
    %515 = vmatpush.bf16.msra.mxu0 %v394
    %516 = vmatpush.bf16.msra.mxu0 %v393
    %517 = vmatmul.bf16.gmra.mxu0 %v161
    %v518 = vpop.f32.mrf.mxu0
    %v519 = vadd.f32 %v506, %v518
    %v520 = vpop.f32.mrf.mxu0
    %521 = vdwg.mxu0
    %522 = vmatpush.bf16.msra.mxu0 %v408
    %523 = vmatpush.bf16.msra.mxu0 %v407
    %524 = vmatpush.bf16.msra.mxu0 %v406
    %525 = vmatpush.bf16.msra.mxu0 %v405
    %526 = vmatpush.bf16.msra.mxu0 %v404
    %527 = vmatpush.bf16.msra.mxu0 %v403
    %528 = vmatpush.bf16.msra.mxu0 %v402
    %529 = vmatpush.bf16.msra.mxu0 %v401
    %530 = vmatmul.bf16.gmra.mxu0 %v162
    %v531 = vpop.f32.mrf.mxu0
    %v532 = vadd.f32 %v519, %v531
    %v533 = vpop.f32.mrf.mxu0
    %534 = vdwg.mxu0
    %535 = vst [vmem:[#allocation7] sm:$0xff] %v532
    // Predicated region
    $region22: #{tpu_custom_call.1} parent=1 // pred_check
      _
    $region23: #{tpu_custom_call.1} parent=1 // pred_check_branch
      %537 = sbr.rel (0) target = $region25
    $region24: #{tpu_custom_call.1} parent=1 // pred_region
      %539 = vsyncadd [#allocation4], 0
      %s541 = sshll.u32 [#allocation7], 4
      %s542 = int_to_ptr.vmem [resolvable:$true] %s541
      %s543 = sshll.u32 %s3, 4
      %s544 = int_to_ptr.hbm [resolvable:$true] %s543
      %546 = dma.vmem_to_hbm [thread:$0]  %s542, 128, %s544, [#allocation4]
    $region25: #{tpu_custom_call.1} parent=1 // pred_fallthru
      _
    // Predicated region
    $region26: #{tpu_custom_call.1} parent=1 // pred_check
      _
    $region27: #{tpu_custom_call.1} parent=1 // pred_check_branch
      %548 = sbr.rel (0) target = $region29
    $region28: #{tpu_custom_call.1} parent=1 // pred_region
      %550 = dma.done [#allocation4], 128
    $region29: #{tpu_custom_call.1} parent=1 // pred_fallthru
      _
    %551 = vsyncpa [#allocation3], 1
    %552 = vsyncpa [#allocation6], 1
    %553 = vsyncpa [#allocation4], 1

</llo_original>
